<compile_context>
chip_gen: v6e
topology: v6e:2x2x1
jax: 0.10.0
libtpu: 0.0.40
codegen_flags: <defaults>
</compile_context>

<pallas_src>
import functools

import jax
import jax.numpy as jnp
from jax.experimental import pallas as pl
from jax.experimental.pallas import tpu as pltpu

_LANES = 128
_COMPUTE_ITEMSIZE = 4  # kernel math runs in f32


def _leaky_softplus_kernel(x_ref, o_ref, *, alpha):
    x = x_ref[...]
    # Compute in f32 for numerical parity with the torch fp32 reference.
    xf = x.astype(jnp.float32)
    softplus = jnp.log1p(jnp.exp(-jnp.abs(xf))) + jnp.maximum(xf, 0.0)
    out = alpha * xf + (1.0 - alpha) * softplus
    o_ref[...] = out.astype(o_ref.dtype)


def _sublane_multiple(dtype) -> int:
    # Sub-32-bit dtypes pack along sublanes: 32-bit -> 8, 16-bit -> 16, 8-bit -> 32.
    bits = jnp.dtype(dtype).itemsize * 8
    return max(8, 8 * (32 // bits))


def _round_up(x: int, m: int) -> int:
    return ((x + m - 1) // m) * m


def _generation_params():
    """Returns (target_block_bytes, vmem_limit_bytes) for this TPU generation."""
    try:
        kind = jax.devices()[0].device_kind.lower()
    except Exception:  # pragma: no cover - be conservative if query fails
        kind = ""
    if any(v in kind for v in ("v2", "v3", "v4", "v5")):
        # v5e: 16 MiB scoped VMEM default -- 2 MiB blocks (8 MiB I/O footprint)
        # already amortize the per-step overhead at ~0.8 TB/s HBM.
        return 2 * 1024 * 1024, None
    # v6e / v7x (or unknown-new): larger blocks recover the per-step overhead
    # at higher HBM bandwidth.  ~16 MiB double-buffered I/O + elementwise
    # temporaries; raise the scoped limit a bit for headroom (<< 64 MiB v7x).
    return 4 * 1024 * 1024, 40 * 1024 * 1024


def _choose_block_rows(rows: int, sub_mult: int, target_bytes: int) -> int:
    """Rows (of 128 lanes) per block."""
    # Size by the f32-intermediate footprint so sub-32-bit inputs don't double
    # VMEM pressure after the in-kernel upcast.
    block_rows = max(sub_mult, target_bytes // (_LANES * _COMPUTE_ITEMSIZE))
    block_rows = (block_rows // sub_mult) * sub_mult
    if rows <= 2 * sub_mult:
        return rows  # tiny input: one full-extent block is fine
    # Medium/large inputs: ensure >= ~4 grid steps so the pipeline overlaps
    # DMA with compute and both v7x TensorCores get work (never grid=(1,)).
    split_cap = _round_up(pl.cdiv(rows, 4), sub_mult)
    return max(sub_mult, min(block_rows, split_cap))


def leaky_softplus(x: jax.Array, alpha: float = 0.1) -> jax.Array:
    orig_shape = x.shape
    dtype = x.dtype
    itemsize = jnp.dtype(dtype).itemsize

    n = x.size
    if n == 0:
        return x

    target_bytes, vmem_limit = _generation_params()
    sub_mult = _sublane_multiple(dtype)
    kernel = functools.partial(_leaky_softplus_kernel, alpha=float(alpha))
    cost = pl.CostEstimate(
        flops=6 * n,
        transcendentals=2 * n,
        bytes_accessed=2 * n * itemsize,
    )
    cparams = pltpu.CompilerParams(
        dimension_semantics=("parallel",),
        vmem_limit_bytes=vmem_limit,
    )

    flat = x.reshape(-1)  # row-major reshape: free bitcast
    rows_ceil = pl.cdiv(n, _LANES)
    block_rows = _choose_block_rows(rows_ceil, sub_mult, target_bytes)

    if n % _LANES == 0:
        # Aligned: lane-dense (block_rows, 128) 2-D view; each block is one
        # contiguous HBM DMA, unmasked stores.
        rows = n // _LANES
        x2d = flat.reshape(rows, _LANES)
        grid = (pl.cdiv(rows, block_rows),)
        out2d = pl.pallas_call(
            kernel,
            out_shape=jax.ShapeDtypeStruct((rows, _LANES), dtype),
            grid_spec=pltpu.PrefetchScalarGridSpec(
                num_scalar_prefetch=0,
                grid=grid,
                in_specs=[pl.BlockSpec((block_rows, _LANES), lambda i: (i, 0))],
                out_specs=pl.BlockSpec((block_rows, _LANES), lambda i: (i, 0)),
            ),
            compiler_params=cparams,
            cost_estimate=cost,
        )(x2d)
        return out2d.reshape(orig_shape)

    # Ragged: run directly on the unpadded flat array (no pad/slice copies).
    # Block length is a multiple of 128 lanes; Pallas masks the partial last
    # block, so the ragged tail is handled in-kernel.
    block_len = block_rows * _LANES
    if block_len >= n:
        block_len = n  # full-extent block is always a legal block shape
        grid = (1,)
    else:
        grid = (pl.cdiv(n, block_len),)
    out_flat = pl.pallas_call(
        kernel,
        out_shape=jax.ShapeDtypeStruct((n,), dtype),
        grid_spec=pltpu.PrefetchScalarGridSpec(
            num_scalar_prefetch=0,
            grid=grid,
            in_specs=[pl.BlockSpec((block_len,), lambda i: (i,))],
            out_specs=pl.BlockSpec((block_len,), lambda i: (i,)),
        ),
        compiler_params=cparams,
        cost_estimate=cost,
    )(flat)
    return out_flat.reshape(orig_shape)


def _leaky_softplus_ref(x, alpha=0.1):
    xf = x.astype(jnp.float32)
    softplus = jnp.log1p(jnp.exp(-jnp.abs(xf))) + jnp.maximum(xf, 0.0)
    return (alpha * xf + (1.0 - alpha) * softplus).astype(x.dtype)


def _check(out, ref, tol):
    diff = jnp.max(jnp.abs(out.astype(jnp.float32) - ref.astype(jnp.float32)))
    assert out.shape == ref.shape and out.dtype == ref.dtype
    assert float(diff) < tol, float(diff)


if __name__ == "__main__":
    key = jax.random.PRNGKey(0)
    k1, k2, k3, k4, k5 = jax.random.split(key, 5)

    # NCHW input, like the PyTorch module would receive (128-aligned size).
    x = jax.random.normal(k1, (2, 4, 16, 16), dtype=jnp.float32)
    _check(jax.block_until_ready(leaky_softplus(x, alpha=0.1)),
           _leaky_softplus_ref(x, alpha=0.1), 1e-5)

    # Ragged size (single full-extent 1-D block, no padding).
    y = jax.random.normal(k2, (3, 5, 7, 11), dtype=jnp.float32)
    _check(jax.block_until_ready(leaky_softplus(y, alpha=0.1)),
           _leaky_softplus_ref(y, alpha=0.1), 1e-5)

    # Aligned, multi-block grid (exercises the pipelined 2-D path).
    z = jax.random.normal(k3, (8, 64, 64), dtype=jnp.float32)
    _check(jax.block_until_ready(leaky_softplus(z, alpha=0.1)),
           _leaky_softplus_ref(z, alpha=0.1), 1e-5)

    # Ragged, multi-block grid (exercises the masked 1-D last block).
    w = jax.random.normal(k4, (3, 700), dtype=jnp.float32)
    _check(jax.block_until_ready(leaky_softplus(w, alpha=0.1)),
           _leaky_softplus_ref(w, alpha=0.1), 1e-5)

    # bf16 input (sublane packing + f32-sized block accounting).
    b = jax.random.normal(k5, (4, 16, 128), dtype=jnp.bfloat16)
    _check(jax.block_until_ready(leaky_softplus(b, alpha=0.1)),
           _leaky_softplus_ref(b, alpha=0.1), 2e-2)

    print("KERNEL_OK")
</pallas_src>

<mosaic_0001>
module attributes {stable_mosaic.version = 11 : i64} {
  func.func @_leaky_softplus_kernel(%arg0: i32, %arg1: memref<16x128xf32, #tpu.memory_space<vmem>>, %arg2: memref<16x128xf32, #tpu.memory_space<vmem>>) attributes {dimension_semantics = [#tpu.dimension_semantics<parallel>], iteration_bounds = array<i64: 1>, scalar_prefetch = 0 : i64, scratch_operands = 0 : i64, tpu.core_type = #tpu.core_type<tc>, window_params = [{transform_indices = @transform_0, window_bounds = array<i64: 16, 128>}, {transform_indices = @transform_1, window_bounds = array<i64: 16, 128>}]} {
    %c0 = arith.constant 0 : index
    %c0_0 = arith.constant 0 : index
    %0 = vector.load %arg1[%c0, %c0_0] : memref<16x128xf32, #tpu.memory_space<vmem>>, vector<16x128xf32>
    %1 = math.absf %0 : vector<16x128xf32>
    %cst = arith.constant 0.000000e+00 : f32
    %2 = vector.broadcast %cst : f32 to vector<16x128xf32>
    %3 = arith.subf %2, %1 : vector<16x128xf32>
    %4 = math.exp %3 : vector<16x128xf32>
    %5 = math.log1p %4 : vector<16x128xf32>
    %cst_1 = arith.constant 0.000000e+00 : f32
    %6 = vector.broadcast %cst_1 : f32 to vector<16x128xf32>
    %7 = arith.maximumf %0, %6 : vector<16x128xf32>
    %8 = arith.addf %5, %7 : vector<16x128xf32>
    %cst_2 = arith.constant 1.000000e-01 : f32
    %9 = vector.broadcast %cst_2 : f32 to vector<16x128xf32>
    %10 = arith.mulf %9, %0 : vector<16x128xf32>
    %cst_3 = arith.constant 0.899999976 : f32
    %11 = vector.broadcast %cst_3 : f32 to vector<16x128xf32>
    %12 = arith.mulf %11, %8 : vector<16x128xf32>
    %13 = arith.addf %10, %12 : vector<16x128xf32>
    %c0_4 = arith.constant 0 : index
    %c0_5 = arith.constant 0 : index
    %14 = vector.load %arg2[%c0_4, %c0_5] : memref<16x128xf32, #tpu.memory_space<vmem>>, vector<16x128xf32>
    tpu.vector_store %arg2[%c0_4, %c0_5], %13 {strides = array<i32>} : memref<16x128xf32, #tpu.memory_space<vmem>>, vector<16x128xf32>,
    return
  }
  func.func @transform_0(%arg0: i32) -> (i32, i32) {
    %c0_i32 = arith.constant 0 : i32
    %c0_i32_0 = arith.constant 0 : i32
    return %arg0, %c0_i32 : i32, i32
  }
  func.func @transform_1(%arg0: i32) -> (i32, i32) {
    %c0_i32 = arith.constant 0 : i32
    %c0_i32_0 = arith.constant 0 : i32
    return %arg0, %c0_i32 : i32, i32
  }
}

</mosaic_0001>

<llo_original>
// kernel: tpu_custom_call.1
$region0: #{tpu_custom_call.1}
  #allocation0 [shape = 'u32[]', space=smem, size = 0x4, offset = 0x4, fixed_abs, tag = 'smem constant byte address 0x4 - core index']
  #allocation1 [shape = 'u32[144,128]{1,0:T(1,128)}', space=vmem, size = 0x12000, scoped, tag = 'internal scratch']
  %s0 = inlined_call_operand.hbm [shape: f32[16,128], index: 0, kind: input, shape index: {}]
  %s1 = inlined_call_operand.hbm [shape: f32[16,128], index: 1, kind: output, shape index: {}]
  %s2 = sld [smem:[#allocation0]]
  $region18: #{tpu_custom_call.1} parent=0
    _
  %s4 = ssub.s32 1, %s2
  %s5 = scalar_select 0, %s4, %s2
  $region1: #{tpu_custom_call.1} parent=0
    #allocation2 [shape = 'u8[8192]{0}', space=vmem, size = 0x2000, scoped, tag = 'input window, operand 0, single buffered']
    #allocation3 [shape = 's32[1]{0}', space=sflag, size = 0x4, scoped, tag = 'scoped memory for tpu_custom_call.1']
    #allocation4 [shape = 's32[1]{0}', space=sflag, size = 0x4, scoped, tag = 'scoped memory for tpu_custom_call.1']
    #allocation5 [shape = 'u8[8192]{0}', space=vmem, size = 0x2000, scoped, tag = 'output window, operand 0, single buffered']
    %6 = vsyncpa [#allocation3], 0
    %7 = vsyncpa [#allocation4], 0
    // Predicated region
    $region2: #{tpu_custom_call.1} parent=1 // pred_check
      _
    $region3: #{tpu_custom_call.1} parent=1 // pred_check_branch
      %9 = sbr.rel (0) target = $region5
    $region4: #{tpu_custom_call.1} parent=1 // pred_region
      %s11 = ssub.s32 256, 256
      %12 = vsyncadd [#allocation3], %s11
      %s13 = sshll.u32 [#allocation2], 4
      %s14 = int_to_ptr.vmem [resolvable:$true] %s13
      %19 = dma.hbm_to_vmem [thread:$0]  %s0, 256, %s14, [#allocation3], 128, 128, 8
    $region5: #{tpu_custom_call.1} parent=1 // pred_fallthru
      _
    // Predicated region
    $region6: #{tpu_custom_call.1} parent=1 // pred_check
      _
    $region7: #{tpu_custom_call.1} parent=1 // pred_check_branch
      %21 = sbr.rel (0) target = $region9
    $region8: #{tpu_custom_call.1} parent=1 // pred_region
      %22 = dma.done [#allocation3], 256
    $region9: #{tpu_custom_call.1} parent=1 // pred_fallthru
      _
    %v23 = vld [vmem:[#allocation2] sm:$0xff]
    %v24 = vld [vmem:[#allocation2 + $0x8] sm:$0xff]
    %v25 = vand.u32 2147483647, %v23
    %v26 = vand.u32 2147483647, %v24
    %v27 = vsub.f32 0.0, %v25
    %v28 = vsub.f32 0.0, %v26
    %v29 = vmul.f32 %v27, 1.442695
    %v30 = vpow.pop %v29
    %v31 = vmul.f32 %v28, 1.442695
    %v32 = vpow.pop %v31
    %v33 = vadd.f32 %v30, 1.0
    %v34 = vlog2.pop %v33
    %v35 = vmul.f32 %v34, 0.6931472
    %v36 = vmul.f32 -0.5, %v30
    %v37 = vadd.f32 %v36, 1.0
    %v38 = vmul.f32 %v37, %v30
    %v39 = vand.u32 2147483647, %v30
    %vm40 = vcmp.lt.f32.partialorder %v39, 0.0004427343
    %v41 = vsel %vm40, %v38, %v35
    %v42 = vadd.f32 %v32, 1.0
    %v43 = vlog2.pop %v42
    %v44 = vmul.f32 %v43, 0.6931472
    %v45 = vmul.f32 -0.5, %v32
    %v46 = vadd.f32 %v45, 1.0
    %v47 = vmul.f32 %v46, %v32
    %v48 = vand.u32 2147483647, %v32
    %vm49 = vcmp.lt.f32.partialorder %v48, 0.0004427343
    %v50 = vsel %vm49, %v47, %v44
    %v51 = vmax.f32 %v23, 0.0
    %v52 = vmax.f32 %v24, 0.0
    %v53 = vadd.f32 %v41, %v51
    %v54 = vadd.f32 %v50, %v52
    %v55 = vmul.f32 %v23, 0.1
    %v56 = vmul.f32 %v24, 0.1
    %v57 = vmul.f32 %v53, 0.9
    %v58 = vmul.f32 %v54, 0.9
    %v59 = vadd.f32 %v55, %v57
    %v60 = vadd.f32 %v56, %v58
    %61 = vst [vmem:[#allocation5] sm:$0xff] %v59
    %62 = vst [vmem:[#allocation5 + $0x8] sm:$0xff] %v60
    // Predicated region
    $region10: #{tpu_custom_call.1} parent=1 // pred_check
      _
    $region11: #{tpu_custom_call.1} parent=1 // pred_check_branch
      %64 = sbr.rel (0) target = $region13
    $region12: #{tpu_custom_call.1} parent=1 // pred_region
      %s66 = ssub.s32 256, 256
      %67 = vsyncadd [#allocation4], %s66
      %s68 = sshll.u32 [#allocation5], 4
      %s69 = int_to_ptr.vmem [resolvable:$true] %s68
      %74 = dma.vmem_to_hbm [thread:$0]  %s69, 256, %s1, [#allocation4], 128, 128, 8
    $region13: #{tpu_custom_call.1} parent=1 // pred_fallthru
      _
    // Predicated region
    $region14: #{tpu_custom_call.1} parent=1 // pred_check
      _
    $region15: #{tpu_custom_call.1} parent=1 // pred_check_branch
      %76 = sbr.rel (0) target = $region17
    $region16: #{tpu_custom_call.1} parent=1 // pred_region
      %77 = dma.done [#allocation4], 256
    $region17: #{tpu_custom_call.1} parent=1 // pred_fallthru
      _
    %78 = vsyncpa [#allocation3], 1
    %79 = vsyncpa [#allocation4], 1

</llo_original>
